<compile_context>
chip_gen: v7x
topology: tpu7x:2x2x1
jax: 0.10.0
libtpu: 0.0.40
codegen_flags: <defaults>
</compile_context>

<pallas_src>
import jax
import jax.numpy as jnp
from jax.experimental import pallas as pl
from jax.experimental.pallas import tpu as pltpu


def _round_up(a, m):
    return ((a + m - 1) // m) * m


def _vmem_capacity_bytes():
    try:
        cap = getattr(pltpu.get_tpu_info(), "vmem_capacity_bytes", None)
        if cap:
            return int(cap)
    except Exception:
        pass
    return 64 << 20  # conservative default (v7x per-TensorCore VMEM)


def _make_matvec_kernel(*, d_total, tile_d, nd, w_full):
    """Builds the kernel body for fixed (static) tiling parameters."""
    n_chunks = tile_d // 128
    tail_len = d_total - (nd - 1) * tile_d      # valid lanes in the last k block
    tail_full = tail_len // 128                 # fully-valid 128-lane chunks there
    tail_rem = tail_len - tail_full * 128       # 0..127 valid lanes in tail chunk

    def kernel(x_ref, w_ref, b_ref, o_ref, acc_ref):
        # x_ref:   (tile_b, tile_d) f32 VMEM block
        # w_ref:   (1, D_pad) f32 (hoisted) or (1, tile_d) f32 (streamed)
        # b_ref:   (1,) f32 in SMEM
        # o_ref:   (tile_b, 1) f32
        # acc_ref: (tile_b, 128) f32 VMEM lane-partial accumulator
        k = pl.program_id(1)

        @pl.when(k == 0)
        def _init():
            acc_ref[...] = jnp.zeros_like(acc_ref)

        def accum(c, n_lanes):
            # 128-lane VPU multiply-accumulate; w is sublane-broadcast.
            x_chunk = x_ref[:, c * 128:(c + 1) * 128]             # (tile_b, 128)
            if w_full:
                off = pl.multiple_of(k * tile_d + c * 128, 128)
                w_chunk = w_ref[:, pl.ds(off, 128)]               # (1, 128)
            else:
                w_chunk = w_ref[:, c * 128:(c + 1) * 128]
            prod = x_chunk * w_chunk
            if n_lanes < 128:
                # Ragged feature tail: x bytes past column D are stale VMEM
                # (could be NaN/Inf), so mask the product (not just the
                # zero-padded weight).  The mask is fully static.
                lane = jax.lax.broadcasted_iota(jnp.int32, (1, 128), 1)
                prod = jnp.where(lane < n_lanes, prod, 0.0)
            acc_ref[...] += prod

        def tail_block():
            for c in range(tail_full):
                accum(c, 128)
            if tail_rem:
                accum(tail_full, tail_rem)

        if nd == 1:
            tail_block()
        else:
            @pl.when(k < nd - 1)
            def _full_block():
                for c in range(n_chunks):
                    accum(c, 128)

            @pl.when(k == nd - 1)
            def _ragged_block():
                tail_block()

        @pl.when(k == nd - 1)
        def _finalize():
            # Single cross-lane reduce per batch tile + bias add.
            y = jnp.sum(acc_ref[...], axis=1, keepdims=True) + b_ref[0]
            o_ref[...] = y.astype(o_ref.dtype)

    return kernel


def logistic_regression_forward(x, weight, bias, *, tile_b=None, tile_d=None):
    """nn.Linear(D, 1) forward: x @ weight.T + bias, as a Pallas TPU kernel.

    x: (B, D) f32, weight: (1, D) f32, bias: (1,) f32 -> (B, 1) f32
    """
    # TODO(synk): if upstream can supply x in bf16, stream it as bf16 and
    # accumulate in f32 (halves HBM traffic); do NOT cast here in the wrapper.
    x = jnp.asarray(x, jnp.float32)
    weight = jnp.asarray(weight, jnp.float32)
    bias = jnp.asarray(bias, jnp.float32).reshape(1)

    B, D = x.shape
    assert weight.shape == (1, D)
    user_tb = tile_b is not None

    # ---- VMEM-driven tile selection ----------------------------------------
    vmem_cap = _vmem_capacity_bytes()
    vmem_budget = int(vmem_cap * 0.75)
    # Target bytes for one (tile_b, tile_d) x block (pipeline double-buffers it).
    x_block_target = max(2 << 20, min(vmem_budget // 3, 32 << 20))

    if tile_b is None:
        # Cap at cdiv(B, 2) rows so the "parallel" batch axis has nb >= 2 and
        # both v7x TensorCores get batch tiles.
        tile_b = min(512, max(8, _round_up(pl.cdiv(B, 2), 8)))
    tile_b = max(8, _round_up(tile_b, 8))

    # Feature tile: multiple of 128, never exceeding the (floored) feature dim,
    # capped so the unrolled in-kernel chunk loop stays modest.
    d_cap = 128 if D < 128 else (D // 128) * 128
    if tile_d is None:
        tile_d = max(128, (x_block_target // (tile_b * 4)) // 128 * 128)
    else:
        tile_d = max(128, _round_up(tile_d, 128))
    tile_d = min(tile_d, d_cap, 16384)

    nd = pl.cdiv(D, tile_d)
    if not user_tb:
        # Grow the batch tile toward the block-size target (fewer grid steps,
        # ~0.35us fixed cost each) while keeping nb >= 2.
        want_tb = x_block_target // (tile_d * 4)
        cap_tb = max(8, _round_up(pl.cdiv(B, 2), 8))
        tile_b = max(tile_b, min(_round_up(max(want_tb, 8), 8), cap_tb, 4096))
    if B >= 8:
        tile_b = min(tile_b, (B // 8) * 8)   # block never exceeds the array
    tile_b = max(8, tile_b)
    nb = pl.cdiv(B, tile_b)
    D_pad = nd * tile_d

    # ---- only degenerate/tiny arrays get padded -----------------------------
    # x streams unpadded; ragged edge blocks are handled in-kernel.  Dims
    # smaller than one tile unit are padded so blocks never exceed the array.
    Bx = B
    if B < 8:
        x = jnp.pad(x, ((0, 8 - B), (0, 0)))
        Bx = 8
    if D < 128:
        x = jnp.pad(x, ((0, 0), (0, 128 - D)))
    if D_pad != D:
        weight = jnp.pad(weight, ((0, 0), (0, D_pad - D)))   # tiny, exact (zeros)

    # Hoist the whole weight row into VMEM (constant block index -> fetched
    # once) unless the sublane-padded row is large; then stream it per k-step.
    w_full = (8 * D_pad * 4) <= (4 << 20)
    w_spec = (pl.BlockSpec((1, D_pad), lambda i, k: (0, 0)) if w_full
              else pl.BlockSpec((1, tile_d), lambda i, k: (0, k)))

    kernel = _make_matvec_kernel(d_total=D, tile_d=tile_d, nd=nd, w_full=w_full)

    # ---- explicit VMEM budget: double-buffered tiles + scratch + headroom ---
    x_blk = tile_b * tile_d * 4
    w_blk = 8 * (D_pad if w_full else tile_d) * 4
    o_blk = tile_b * 128 * 4                    # (tile_b, 1) lane-pads to 128
    acc_blk = tile_b * 128 * 4
    vmem_needed = 2 * (x_blk + w_blk + o_blk) + acc_blk + (2 << 20)
    vmem_limit = int(min(max(vmem_needed, 16 << 20), vmem_cap))

    out = pl.pallas_call(
        kernel,
        out_shape=jax.ShapeDtypeStruct((Bx, 1), jnp.float32),
        grid_spec=pltpu.PrefetchScalarGridSpec(
            num_scalar_prefetch=0,
            grid=(nb, nd),
            in_specs=[
                pl.BlockSpec((tile_b, tile_d), lambda i, k: (i, k)),   # x tile
                w_spec,                                                # weight
                pl.BlockSpec(memory_space=pltpu.MemorySpace.SMEM),     # bias
            ],
            out_specs=pl.BlockSpec((tile_b, 1), lambda i, k: (i, 0)),
            scratch_shapes=[pltpu.VMEM((tile_b, 128), jnp.float32)],
        ),
        compiler_params=pltpu.CompilerParams(
            dimension_semantics=("parallel", "arbitrary"),
            vmem_limit_bytes=vmem_limit,
        ),
    )(x, weight, bias)

    return out[:B]


if __name__ == "__main__":
    key = jax.random.PRNGKey(0)
    keys = jax.random.split(key, 9)
    kx, kw, kb, kx2, kw2, kb2, kx3, kw3, kb3 = keys

    # --- Case 1: module-sized toy shapes (batch=8, input_dim=32) ------------
    B, D = 8, 32
    x_raw = jax.random.uniform(kx, (B, D), dtype=jnp.float32)
    mean = jnp.mean(x_raw, axis=0)
    std = jnp.std(x_raw, axis=0, ddof=1)          # torch.std uses Bessel's correction
    x = (x_raw - mean) / std
    bound = 1.0 / jnp.sqrt(jnp.float32(D))
    weight = jax.random.uniform(kw, (1, D), jnp.float32, -bound, bound)
    bias = jax.random.uniform(kb, (1,), jnp.float32, -bound, bound)

    out = jax.block_until_ready(logistic_regression_forward(x, weight, bias))
    ref = x @ weight.T + bias
    assert out.shape == (B, 1)
    assert jnp.allclose(out, ref, atol=1e-5, rtol=1e-5)

    # --- Case 2: ragged B and D, multi-step reduction grid + tail mask ------
    B2, D2 = 20, 400
    x2 = jax.random.normal(kx2, (B2, D2), dtype=jnp.float32)
    bound2 = 1.0 / jnp.sqrt(jnp.float32(D2))
    w2 = jax.random.uniform(kw2, (1, D2), jnp.float32, -bound2, bound2)
    b2 = jax.random.uniform(kb2, (1,), jnp.float32, -bound2, bound2)

    out2 = jax.block_until_ready(
        logistic_regression_forward(x2, w2, b2, tile_b=8, tile_d=128))
    ref2 = x2 @ w2.T + b2
    assert out2.shape == (B2, 1)
    assert jnp.allclose(out2, ref2, atol=1e-4, rtol=1e-4)

    # --- Case 3: default (auto) tiles on ragged shapes -----------------------
    B3, D3 = 24, 300
    x3 = jax.random.normal(kx3, (B3, D3), dtype=jnp.float32)
    bound3 = 1.0 / jnp.sqrt(jnp.float32(D3))
    w3 = jax.random.uniform(kw3, (1, D3), jnp.float32, -bound3, bound3)
    b3 = jax.random.uniform(kb3, (1,), jnp.float32, -bound3, bound3)

    out3 = jax.block_until_ready(logistic_regression_forward(x3, w3, b3))
    ref3 = x3 @ w3.T + b3
    assert out3.shape == (B3, 1)
    assert jnp.allclose(out3, ref3, atol=1e-4, rtol=1e-4)

    print("KERNEL_OK")
</pallas_src>

<mosaic_0001>
module attributes {stable_mosaic.version = 11 : i64} {
  func.func @kernel(%arg0: i32, %arg1: i32, %arg2: memref<8x128xf32, #tpu.memory_space<vmem>>, %arg3: memref<1x128xf32, #tpu.memory_space<vmem>>, %arg4: memref<1xf32, #tpu.memory_space<smem>>, %arg5: memref<8x1xf32, #tpu.memory_space<vmem>>, %arg6: memref<8x128xf32, #tpu.memory_space<vmem>>) attributes {dimension_semantics = [#tpu.dimension_semantics<parallel>, #tpu.dimension_semantics<arbitrary>], iteration_bounds = array<i64: 1, 1>, scalar_prefetch = 0 : i64, scratch_operands = 1 : i64, tpu.core_type = #tpu.core_type<tc>, window_params = [{transform_indices = @transform_0, window_bounds = array<i64: 8, 128>}, {pipeline_mode = #tpu.pipeline_mode<synchronous>, transform_indices = @transform_1, window_bounds = array<i64: 1, 128>}, {transform_indices = @transform_2, window_bounds = array<i64: 1>}, {transform_indices = @transform_3, window_bounds = array<i64: 8, 1>}]} {
    %c0_i32 = arith.constant 0 : i32
    %0 = arith.cmpi eq, %arg1, %c0_i32 : i32
    %1 = arith.extui %0 : i1 to i32
    %c0_i32_0 = arith.constant 0 : i32
    %2 = arith.cmpi ne, %1, %c0_i32_0 : i32
    scf.if %2 {
      %cst_10 = arith.constant 0.000000e+00 : f32
      %24 = vector.broadcast %cst_10 : f32 to vector<8x128xf32>
      %c0_11 = arith.constant 0 : index
      %c0_12 = arith.constant 0 : index
      %25 = vector.load %arg6[%c0_11, %c0_12] : memref<8x128xf32, #tpu.memory_space<vmem>>, vector<8x128xf32>
      tpu.vector_store %arg6[%c0_11, %c0_12], %24 {strides = array<i32>} : memref<8x128xf32, #tpu.memory_space<vmem>>, vector<8x128xf32>,
    } else {
    }
    %c0 = arith.constant 0 : index
    %c0_1 = arith.constant 0 : index
    %3 = vector.load %arg2[%c0, %c0_1] : memref<8x128xf32, #tpu.memory_space<vmem>>, vector<8x128xf32>
    %c128_i32 = arith.constant 128 : i32
    %4 = arith.muli %arg1, %c128_i32 : i32
    %c0_i32_2 = arith.constant 0 : i32
    %5 = arith.addi %4, %c0_i32_2 : i32
    %6 = tpu.assume_multiple %5, 128 : i32
    %c0_3 = arith.constant 0 : index
    %7 = arith.index_cast %6 : i32 to index
    %8 = vector.load %arg3[%c0_3, %7] : memref<1x128xf32, #tpu.memory_space<vmem>>, vector<1x128xf32>
    %9 = vector.broadcast %8 : vector<1x128xf32> to vector<8x128xf32>
    %10 = arith.mulf %3, %9 : vector<8x128xf32>
    %11 = tpu.iota {dimensions = array<i32: 1>} : vector<1x128xi32>
    %c32_i32 = arith.constant 32 : i32
    %12 = vector.broadcast %c32_i32 : i32 to vector<1x128xi32>
    %13 = arith.cmpi slt, %11, %12 : vector<1x128xi32>
    %cst = arith.constant 0.000000e+00 : f32
    %14 = vector.shape_cast %13 : vector<1x128xi1> to vector<1x128xi1>
    %15 = vector.broadcast %14 : vector<1x128xi1> to vector<8x128xi1>
    %16 = vector.broadcast %cst : f32 to vector<8x128xf32>
    %17 = arith.select %15, %10, %16 : vector<8x128xi1>, vector<8x128xf32>
    %c0_4 = arith.constant 0 : index
    %c0_5 = arith.constant 0 : index
    %18 = vector.load %arg6[%c0_4, %c0_5] : memref<8x128xf32, #tpu.memory_space<vmem>>, vector<8x128xf32>
    %19 = arith.addf %18, %17 : vector<8x128xf32>
    %c0_6 = arith.constant 0 : index
    %c0_7 = arith.constant 0 : index
    %20 = vector.load %arg6[%c0_6, %c0_7] : memref<8x128xf32, #tpu.memory_space<vmem>>, vector<8x128xf32>
    tpu.vector_store %arg6[%c0_6, %c0_7], %19 {strides = array<i32>} : memref<8x128xf32, #tpu.memory_space<vmem>>, vector<8x128xf32>,
    %c0_i32_8 = arith.constant 0 : i32
    %21 = arith.cmpi eq, %arg1, %c0_i32_8 : i32
    %22 = arith.extui %21 : i1 to i32
    %c0_i32_9 = arith.constant 0 : i32
    %23 = arith.cmpi ne, %22, %c0_i32_9 : i32
    scf.if %23 {
      %c0_10 = arith.constant 0 : index
      %c0_11 = arith.constant 0 : index
      %24 = vector.load %arg6[%c0_10, %c0_11] : memref<8x128xf32, #tpu.memory_space<vmem>>, vector<8x128xf32>
      %cst_12 = arith.constant dense<0.000000e+00> : vector<8xf32>
      %25 = vector.multi_reduction <add>, %24, %cst_12 [1] : vector<8x128xf32> to vector<8xf32>
      %26 = vector.shape_cast %25 : vector<8xf32> to vector<8x1xf32>
      %c0_13 = arith.constant 0 : index
      %27 = memref.load %arg4[%c0_13] : memref<1xf32, #tpu.memory_space<smem>>
      %28 = vector.broadcast %27 : f32 to vector<8x1xf32>
      %29 = arith.addf %26, %28 : vector<8x1xf32>
      %c0_14 = arith.constant 0 : index
      %c0_15 = arith.constant 0 : index
      %30 = vector.load %arg5[%c0_14, %c0_15] : memref<8x1xf32, #tpu.memory_space<vmem>>, vector<8x1xf32>
      tpu.vector_store %arg5[%c0_14, %c0_15], %29 {strides = array<i32>} : memref<8x1xf32, #tpu.memory_space<vmem>>, vector<8x1xf32>,
    } else {
    }
    return
  }
  func.func @transform_0(%arg0: i32, %arg1: i32) -> (i32, i32) {
    %c0_i32 = arith.constant 0 : i32
    return %arg0, %arg1 : i32, i32
  }
  func.func @transform_1(%arg0: i32, %arg1: i32) -> (i32, i32) {
    %c0_i32 = arith.constant 0 : i32
    %c0_i32_0 = arith.constant 0 : i32
    %c0_i32_1 = arith.constant 0 : i32
    return %c0_i32, %c0_i32_0 : i32, i32
  }
  func.func @transform_2(%arg0: i32, %arg1: i32) -> i32 {
    %c0_i32 = arith.constant 0 : i32
    %c0_i32_0 = arith.constant 0 : i32
    return %c0_i32 : i32
  }
  func.func @transform_3(%arg0: i32, %arg1: i32) -> (i32, i32) {
    %c0_i32 = arith.constant 0 : i32
    %c0_i32_0 = arith.constant 0 : i32
    return %arg0, %c0_i32 : i32, i32
  }
}

</mosaic_0001>

<llo_original>
// kernel: tpu_custom_call.1
$region0: #{tpu_custom_call.1}
  #allocation0 [shape = 'u32[]', space=smem, size = 0x4, offset = 0x4, fixed_abs, tag = 'smem constant byte address 0x4 - core index']
  #allocation1 [shape = 'u32[144,128]{1,0:T(1,128)}', space=vmem, size = 0x12000, scoped, tag = 'internal scratch']
  #allocation2 [shape = 'f32[8,128]{1,0:T(8,128)}', space=vmem, size = 0x1000, scoped, tag = 'scratch operand']
  #allocation3 [shape = 'f32[1]{0:T(128)S(6)}', space=smem, size = 0x200, scoped, tag = 'scoped memory for tpu_custom_call.1']
  %s0 = inlined_call_operand.hbm [shape: f32[8,128], index: 0, kind: input, shape index: {}]
  %s1 = inlined_call_operand.vmem [shape: f32[1,128], index: 1, kind: input, shape index: {}]
  %s2 = inlined_call_operand.<no memory space> [shape: f32[1], index: 2, kind: input, shape index: {}]
  %s3 = inlined_call_operand.vmem [shape: f32[8,1], index: 3, kind: output, shape index: {}]
  %s4 = sld [smem:[#allocation0]]
  $region34: #{tpu_custom_call.1} parent=0
    _
  %s6 = ssub.s32 1, %s4
  %s7 = scalar_select 0, %s6, %s4
  %8 = sst [smem:[#allocation3]] %s2
  $region1: #{tpu_custom_call.1} parent=0
    #allocation4 [shape = 'u8[4096]{0}', space=vmem, size = 0x1000, scoped, tag = 'input window, operand 0, single buffered']
    #allocation5 [shape = 's32[1]{0}', space=sflag, size = 0x4, scoped, tag = 'scoped memory for tpu_custom_call.1']
    %9 = vsyncpa [#allocation5], 0
    // Predicated region
    $region2: #{tpu_custom_call.1} parent=1 // pred_check
      _
    $region3: #{tpu_custom_call.1} parent=1 // pred_check_branch
      %11 = sbr.rel (0) target = $region5
    $region4: #{tpu_custom_call.1} parent=1 // pred_region
      %s13 = ssub.s32 128, 128
      %14 = vsyncadd [#allocation5], %s13
      %s16 = sshll.u32 [#allocation4], 4
      %s17 = int_to_ptr.vmem [resolvable:$true] %s16
      %19 = dma.hbm_to_vmem [thread:$0]  %s0, 128, %s17, [#allocation5]
    $region5: #{tpu_custom_call.1} parent=1 // pred_fallthru
      _
    // Predicated region
    $region6: #{tpu_custom_call.1} parent=1 // pred_check
      _
    $region7: #{tpu_custom_call.1} parent=1 // pred_check_branch
      %21 = sbr.rel (0) target = $region9
    $region8: #{tpu_custom_call.1} parent=1 // pred_region
      _
    $region9: #{tpu_custom_call.1} parent=1 // pred_fallthru
      _
    // Predicated region
    $region10: #{tpu_custom_call.1} parent=1 // pred_check
      _
    $region11: #{tpu_custom_call.1} parent=1 // pred_check_branch
      %23 = sbr.rel (0) target = $region13
    $region12: #{tpu_custom_call.1} parent=1 // pred_region
      _
    $region13: #{tpu_custom_call.1} parent=1 // pred_fallthru
      _
    // Predicated region
    $region14: #{tpu_custom_call.1} parent=1 // pred_check
      _
    $region15: #{tpu_custom_call.1} parent=1 // pred_check_branch
      %25 = sbr.rel (0) target = $region17
    $region16: #{tpu_custom_call.1} parent=1 // pred_region
      %26 = dma.done [#allocation5], 128
    $region17: #{tpu_custom_call.1} parent=1 // pred_fallthru
      _
    %p27 = scmp.eq.s32.totalorder 0, 0
    // Predicated region
    $region18: #{tpu_custom_call.1} parent=1 // pred_check
      %p28 = pneg %p27
    $region19: #{tpu_custom_call.1} parent=1 // pred_check_branch
      %30 = sbr.rel (%p28) target = $region21
    $region20: #{tpu_custom_call.1} parent=1 // pred_region
      %31 = vst [vmem:[#allocation2] sm:$0xff] 0.0
    $region21: #{tpu_custom_call.1} parent=1 // pred_fallthru
      _
    %v32 = vld [vmem:[#allocation4] sm:$0xff]
    %s33 = smul.u32 0, 128
    %s34 = sshra.s32 %s33, 7
    %s35 = sand.u32 %s33, 127
    %s36 = scalar_lea.vmem %s1, %s34
    %v37 = vld [vmem:[%s36] sm:$0x1]
    %v39 = vlaneseq
    %v40 = vshrl.u32 %v39, 7
    %v41 = vsub.s32 0, %v40
    %v42 = vrot.slane %v37, %v41
    %v44 = vmul.f32 %v32, %v42
    %v45 = vlaneseq
    %v46 = vand.u32 %v45, 127
    %vm47 = vcmp.lt.s32.totalorder %v46, 32
    %v48 = vsel %vm47, 1, 0
    %vm49 = vcmp.eq.s32.totalorder %v48, 1
    %v50 = vsel %vm49, %v44, 0.0
    %v51 = vld [vmem:[#allocation2] sm:$0xff]
    %v52 = vadd.f32 %v51, %v50
    %53 = vst [vmem:[#allocation2] sm:$0xff] %v52
    // Predicated region
    $region22: #{tpu_custom_call.1} parent=1 // pred_check
      %p54 = pneg %p27
    $region23: #{tpu_custom_call.1} parent=1 // pred_check_branch
      %56 = sbr.rel (%p54) target = $region25
    $region24: #{tpu_custom_call.1} parent=1 // pred_region
      %v57 = vld [vmem:[#allocation2] sm:$0xff]
      %58 = vadd.xlane.f32.xlu0 %v57
      %v59 = vpop.xlane.xlu0 %58
      %s60 = sld [smem:[#allocation3]]
      %v61 = vstv %s60
      %v62 = vadd.f32 %v59, %v61
      %vm63 = vcmask 7168
      %64 = vst.msk [vmem:[%s3] sm:$0xff] %vm63, %v62
    $region25: #{tpu_custom_call.1} parent=1 // pred_fallthru
      _
    // Predicated region
    $region26: #{tpu_custom_call.1} parent=1 // pred_check
      _
    $region27: #{tpu_custom_call.1} parent=1 // pred_check_branch
      %66 = sbr.rel (0) target = $region29
    $region28: #{tpu_custom_call.1} parent=1 // pred_region
      _
    $region29: #{tpu_custom_call.1} parent=1 // pred_fallthru
      _
    // Predicated region
    $region30: #{tpu_custom_call.1} parent=1 // pred_check
      _
    $region31: #{tpu_custom_call.1} parent=1 // pred_check_branch
      %68 = sbr.rel (0) target = $region33
    $region32: #{tpu_custom_call.1} parent=1 // pred_region
      _
    $region33: #{tpu_custom_call.1} parent=1 // pred_fallthru
      _
    %69 = vsyncpa [#allocation5], 1

</llo_original>
